<compile_context>
chip_gen: v5e
topology: v5e:2x2
jax: 0.10.0
libtpu: 0.0.40
codegen_flags: <defaults>
</compile_context>

<pallas_src>
import numpy as np
import jax
import jax.numpy as jnp
from jax.experimental import pallas as pl
from jax.experimental.pallas import tpu as pltpu


_LANES = 128
_SUBLANES = 8


def _round_up(x, m):
    return ((x + m - 1) // m) * m


def _physical_vmem_bytes():
    """Per-core VMEM capacity; conservative (v7x, 64 MiB) fallback on failure."""
    try:
        return int(pltpu.get_tpu_info().vmem_capacity_bytes)
    except Exception:
        return 64 << 20


def _pick_batch_tile(B, cap=1024):
    """Large tile to amortize per-grid-step overhead, but keep >= 2 grid steps
    (when B allows) so a v7x megacore can shard the 'parallel' batch axis."""
    if B <= _SUBLANES:
        return B                    # block == full dim -> always a legal spec
    half = _round_up((B + 1) // 2, _SUBLANES)
    return max(_SUBLANES, min(cap, half))


def _coupling_width(db):
    """Kernel-side column width for xb / yb / s / t.

    For narrow couplings keep the true width (masked partial stores cost a few
    cycles per tile, far cheaper than padding the HBM traffic out to 128
    lanes); only pad when db is already a large fraction of a 128-lane vreg."""
    if db % _LANES == 0 or db < 96:
        return db
    return _round_up(db, _LANES)


# ----------------------------------------------------------------------------
# Kernel
# ----------------------------------------------------------------------------
def _coupling_kernel(xa_ref, cond_ref, xb_ref,
                     w1a_ref, w1c_ref, b1_ref,
                     w2_ref, b2_ref,
                     w3s_ref, b3s_ref, w3t_ref, b3t_ref,
                     yb_ref, ld_ref):
    """One batch tile: 3-layer MLP -> tanh/exp -> affine couple -> log-det."""
    mxu = w1a_ref.dtype   # MXU dtype (bf16 by default, f32 in strict mode)

    # Linear 1, split over [xa | cond] (no HBM-materialized concat), f32 accum.
    h1 = (jnp.dot(xa_ref[...], w1a_ref[...], preferred_element_type=jnp.float32)
          + jnp.dot(cond_ref[...], w1c_ref[...], preferred_element_type=jnp.float32)
          + b1_ref[...])
    h1 = jnp.maximum(h1, 0.0).astype(mxu)

    # Linear 2 + ReLU.
    h2 = jnp.dot(h1, w2_ref[...], preferred_element_type=jnp.float32) + b2_ref[...]
    h2 = jnp.maximum(h2, 0.0).astype(mxu)

    # Linear 3 as two heads (s, t): never an unaligned lane slice, any db.
    s = jnp.tanh(jnp.dot(h2, w3s_ref[...], preferred_element_type=jnp.float32)
                 + b3s_ref[...])
    t = jnp.dot(h2, w3t_ref[...], preferred_element_type=jnp.float32) + b3t_ref[...]

    # Affine coupling (f32).  If db was padded, the pad columns of xb / w3s /
    # w3t / b3* are exact zeros, so s == 0 there and the log-det is unchanged.
    yb_ref[...] = xb_ref[...] * jnp.exp(s) + t
    ld_ref[...] = jnp.sum(s, axis=-1, keepdims=True)


# ----------------------------------------------------------------------------
# Pallas wrapper
# ----------------------------------------------------------------------------
def coupling_pallas(xa, cond, xb, kernel_params, *, batch_tile=None):
    """Run the coupling kernel over batch tiles with VMEM-resident weights."""
    w1a, w1c, b1, w2, b2, w3s, b3s, w3t, b3t = kernel_params
    B, da = xa.shape
    cond_dim = cond.shape[1]
    db_p = xb.shape[1]
    hidden = b1.shape[1]
    mxu_dtype = w1a.dtype

    # Cast the MLP inputs once in the wrapper: numerically identical to casting
    # inside the kernel, but halves their HBM read / DMA volume.  xb stays f32.
    xa_k = xa.astype(mxu_dtype)
    cond_k = cond.astype(mxu_dtype)

    tb = _pick_batch_tile(B) if batch_tile is None else int(batch_tile)
    n_tiles = pl.cdiv(B, tb)       # ragged last tile: OOB rows never written

    # VMEM budget: double-buffered activation tiles + resident weights +
    # f32 intermediates + margin, clamped by this generation's capacity.
    in_bytes = tb * (da * xa_k.dtype.itemsize + cond_dim * cond_k.dtype.itemsize
                     + db_p * xb.dtype.itemsize)
    out_bytes = tb * (db_p + 1) * 4
    w_bytes = sum(int(np.prod(w.shape)) * w.dtype.itemsize for w in kernel_params)
    inter_bytes = tb * (2 * hidden + 2 * db_p) * 4
    need = 2 * (in_bytes + out_bytes) + 2 * w_bytes + inter_bytes + (8 << 20)
    vmem_limit = int(min(max(need, 32 << 20), _physical_vmem_bytes() - (8 << 20)))

    def run(weight_buffers):
        extra = ({} if weight_buffers is None
                 else {"pipeline_mode": pl.Buffered(weight_buffers)})

        def act_spec(width):
            return pl.BlockSpec((tb, width), lambda i: (i, 0))

        def weight_spec(arr):
            # Constant index map -> DMA'd once, stays resident across the grid.
            return pl.BlockSpec(arr.shape, lambda i: (0, 0), **extra)

        return pl.pallas_call(
            _coupling_kernel,
            out_shape=(
                jax.ShapeDtypeStruct((B, db_p), jnp.float32),
                jax.ShapeDtypeStruct((B, 1), jnp.float32),
            ),
            grid_spec=pltpu.PrefetchScalarGridSpec(
                num_scalar_prefetch=0,
                grid=(n_tiles,),
                in_specs=[
                    act_spec(da), act_spec(cond_dim), act_spec(db_p),
                    weight_spec(w1a), weight_spec(w1c), weight_spec(b1),
                    weight_spec(w2), weight_spec(b2),
                    weight_spec(w3s), weight_spec(b3s),
                    weight_spec(w3t), weight_spec(b3t),
                ],
                out_specs=(
                    pl.BlockSpec((tb, db_p), lambda i: (i, 0)),
                    pl.BlockSpec((tb, 1), lambda i: (i, 0)),
                ),
            ),
            compiler_params=pltpu.CompilerParams(
                dimension_semantics=("parallel",),
                vmem_limit_bytes=vmem_limit,
            ),
        )(xa_k, cond_k, xb, w1a, w1c, b1, w2, b2, w3s, b3s, w3t, b3t)

    try:
        # Grid-invariant weights only need a single VMEM buffer (halves their
        # footprint -- relevant on v7x's 64 MiB VMEM for large hidden).
        yb, ld = run(1)
    except Exception:
        # Graceful fallback for jax versions without single-buffer support.
        yb, ld = run(None)

    return yb, jnp.squeeze(ld, axis=1)


# ----------------------------------------------------------------------------
# Mask split / combine (static mask -> pure layout ops in JAX glue)
# ----------------------------------------------------------------------------
def _mask_indices(mask):
    mask = np.asarray(mask, dtype=bool)
    return np.nonzero(mask)[0], np.nonzero(~mask)[0]


def _is_alternating(mask):
    # Fast path only for [True, False, True, False, ...]; any other mask
    # (including [False, True, ...]) uses the still-correct static gather path.
    mask = np.asarray(mask, dtype=bool)
    d = mask.shape[0]
    return d % 2 == 0 and np.array_equal(mask, np.tile([True, False], d // 2))


def _split_halves(x, mask):
    if _is_alternating(mask):
        B, d = x.shape
        xr = x.reshape(B, d // 2, 2)
        return xr[:, :, 0], xr[:, :, 1]
    idx_a, idx_b = _mask_indices(mask)
    return x[:, idx_a], x[:, idx_b]


def _combine_halves(xa, yb, mask, dim):
    if _is_alternating(mask):
        B = xa.shape[0]
        return jnp.stack([xa, yb], axis=-1).reshape(B, dim)
    idx_a, idx_b = _mask_indices(mask)
    y = jnp.zeros((xa.shape[0], dim), dtype=xa.dtype)
    y = y.at[:, idx_a].set(xa)
    y = y.at[:, idx_b].set(yb)
    return y


# ----------------------------------------------------------------------------
# Full forward (matches _Coupling.forward semantics)
# ----------------------------------------------------------------------------
def coupling_forward(x, cond, mask, kernel_params, *, batch_tile=None):
    mask = np.asarray(mask, dtype=bool)
    dim = x.shape[1]
    xa, xb = _split_halves(x, mask)       # xa keeps f32 precision for passthrough
    db = xb.shape[1]
    db_p = kernel_params[5].shape[1]      # w3s width == kernel yb width
    xb_k = xb if db_p == db else jnp.pad(xb, ((0, 0), (0, db_p - db)))

    yb_p, log_det = coupling_pallas(xa, cond, xb_k, kernel_params,
                                    batch_tile=batch_tile)
    yb = yb_p if db_p == db else yb_p[:, :db]
    y = _combine_halves(xa, yb, mask, dim)
    return y, log_det


# ----------------------------------------------------------------------------
# Parameters
# ----------------------------------------------------------------------------
def init_raw_params(key, in_dim, hidden, out_dim):
    """Synthetic f32 'master' parameters in (in, out) layout (no checkpoint)."""
    k1, k2, k3, k4, k5, k6 = jax.random.split(key, 6)
    w1 = jax.random.normal(k1, (in_dim, hidden), jnp.float32) * 0.1
    b1 = jax.random.normal(k2, (hidden,), jnp.float32) * 0.01
    w2 = jax.random.normal(k3, (hidden, hidden), jnp.float32) * 0.1
    b2 = jax.random.normal(k4, (hidden,), jnp.float32) * 0.01
    w3 = jax.random.normal(k5, (hidden, out_dim), jnp.float32) * 0.1
    b3 = jax.random.normal(k6, (out_dim,), jnp.float32) * 0.01
    return w1, b1, w2, b2, w3, b3


def prepare_kernel_params(raw_params, da, cond_dim, hidden, db,
                          mxu_dtype=jnp.bfloat16):
    """Split / (conditionally) pad / cast raw params into kernel-ready form.

    - w1 is split into xa / cond halves (no run-time HBM concat).
    - w3 is split into s / t heads (no unaligned lane slice in-kernel).
    - Columns are padded to db_p only when _coupling_width decides to pad; the
      pad columns are exact zeros so the log-det stays exact.
    - Weights use mxu_dtype (bf16 default -> MXU fast path); biases stay f32 and
      are added after the f32 accumulation.  Pass mxu_dtype=jnp.float32 for a
      strict-f32 path.
    """
    w1, b1, w2, b2, w3, b3 = raw_params
    db_p = _coupling_width(db)

    def padc(a, cols):
        return jnp.pad(a, ((0, 0), (0, cols - a.shape[1])))

    w1a = w1[:da, :].astype(mxu_dtype)
    w1c = w1[da:da + cond_dim, :].astype(mxu_dtype)
    b1p = b1.reshape(1, hidden).astype(jnp.float32)
    w2p = w2.astype(mxu_dtype)
    b2p = b2.reshape(1, hidden).astype(jnp.float32)
    w3s = padc(w3[:, :db], db_p).astype(mxu_dtype)
    w3t = padc(w3[:, db:], db_p).astype(mxu_dtype)
    b3s = padc(b3[:db].reshape(1, db), db_p).astype(jnp.float32)
    b3t = padc(b3[db:].reshape(1, db), db_p).astype(jnp.float32)
    return (w1a, w1c, b1p, w2p, b2p, w3s, b3s, w3t, b3t)


# ----------------------------------------------------------------------------
# Pure-JAX reference (mirrors the PyTorch module; same bf16-at-the-MXU policy
# as the kernel so results are directly comparable)
# ----------------------------------------------------------------------------
def coupling_forward_ref(x, cond, mask, raw_params, mxu_dtype=jnp.bfloat16):
    w1, b1, w2, b2, w3, b3 = raw_params
    idx_a, idx_b = _mask_indices(mask)
    xa = x[:, idx_a]
    xb = x[:, idx_b]

    def mm(a, w):
        return jnp.dot(a.astype(mxu_dtype), w.astype(mxu_dtype),
                       preferred_element_type=jnp.float32)

    h = jnp.concatenate([xa, cond], axis=-1)
    h = jnp.maximum(mm(h, w1) + b1, 0.0)
    h = jnp.maximum(mm(h, w2) + b2, 0.0)
    st = mm(h, w3) + b3
    db = xb.shape[1]
    s = jnp.tanh(st[:, :db])
    t = st[:, db:]
    yb = xb * jnp.exp(s) + t
    log_det = jnp.sum(s, axis=-1)
    y = jnp.zeros_like(x)
    y = y.at[:, idx_a].set(xa)
    y = y.at[:, idx_b].set(yb)
    return y, log_det


# ----------------------------------------------------------------------------
# Demo / self-check
# ----------------------------------------------------------------------------
if __name__ == "__main__":
    dim, cond_dim, hidden = 8, 4, 32
    key = jax.random.PRNGKey(0)

    configs = [
        # alternating mask -> reshape fast path, single batch tile
        (8, np.array([True, False] * (dim // 2))),
        # generic mask -> static gather path; B=12 -> two tiles, ragged tail
        (12, np.array([True, True, False, False] * (dim // 4))),
    ]
    for B, mask in configs:
        key, kx, kc, kp = jax.random.split(key, 4)
        x = jax.random.normal(kx, (B, dim), jnp.float32)
        cond = jax.random.normal(kc, (B, cond_dim), jnp.float32)

        da = int(mask.sum())
        db = dim - da
        raw = init_raw_params(kp, da + cond_dim, hidden, 2 * db)
        kparams = prepare_kernel_params(raw, da, cond_dim, hidden, db)

        y, log_det = coupling_forward(x, cond, mask, kparams)
        y = jax.block_until_ready(y)
        log_det = jax.block_until_ready(log_det)

        y_ref, ld_ref = coupling_forward_ref(x, cond, mask, raw)
        np.testing.assert_allclose(np.asarray(y), np.asarray(y_ref),
                                   rtol=1e-4, atol=1e-4)
        np.testing.assert_allclose(np.asarray(log_det), np.asarray(ld_ref),
                                   rtol=1e-4, atol=1e-4)

    print("KERNEL_OK")
</pallas_src>

<mosaic_0001>
module attributes {stable_mosaic.version = 11 : i64} {
  func.func @_coupling_kernel(%arg0: i32, %arg1: memref<8x4xbf16, #tpu.memory_space<vmem>>, %arg2: memref<8x4xbf16, #tpu.memory_space<vmem>>, %arg3: memref<8x4xf32, #tpu.memory_space<vmem>>, %arg4: memref<4x32xbf16, #tpu.memory_space<vmem>>, %arg5: memref<4x32xbf16, #tpu.memory_space<vmem>>, %arg6: memref<1x32xf32, #tpu.memory_space<vmem>>, %arg7: memref<32x32xbf16, #tpu.memory_space<vmem>>, %arg8: memref<1x32xf32, #tpu.memory_space<vmem>>, %arg9: memref<32x4xbf16, #tpu.memory_space<vmem>>, %arg10: memref<1x4xf32, #tpu.memory_space<vmem>>, %arg11: memref<32x4xbf16, #tpu.memory_space<vmem>>, %arg12: memref<1x4xf32, #tpu.memory_space<vmem>>, %arg13: memref<8x4xf32, #tpu.memory_space<vmem>>, %arg14: memref<8x1xf32, #tpu.memory_space<vmem>>) attributes {dimension_semantics = [#tpu.dimension_semantics<parallel>], iteration_bounds = array<i64: 1>, scalar_prefetch = 0 : i64, scratch_operands = 0 : i64, tpu.core_type = #tpu.core_type<tc>, window_params = [{transform_indices = @transform_0, window_bounds = array<i64: 8, 4>}, {transform_indices = @transform_1, window_bounds = array<i64: 8, 4>}, {transform_indices = @transform_2, window_bounds = array<i64: 8, 4>}, {pipeline_mode = #tpu.pipeline_mode<synchronous>, transform_indices = @transform_3, window_bounds = array<i64: 4, 32>}, {pipeline_mode = #tpu.pipeline_mode<synchronous>, transform_indices = @transform_4, window_bounds = array<i64: 4, 32>}, {pipeline_mode = #tpu.pipeline_mode<synchronous>, transform_indices = @transform_5, window_bounds = array<i64: 1, 32>}, {pipeline_mode = #tpu.pipeline_mode<synchronous>, transform_indices = @transform_6, window_bounds = array<i64: 32, 32>}, {pipeline_mode = #tpu.pipeline_mode<synchronous>, transform_indices = @transform_7, window_bounds = array<i64: 1, 32>}, {pipeline_mode = #tpu.pipeline_mode<synchronous>, transform_indices = @transform_8, window_bounds = array<i64: 32, 4>}, {pipeline_mode = #tpu.pipeline_mode<synchronous>, transform_indices = @transform_9, window_bounds = array<i64: 1, 4>}, {pipeline_mode = #tpu.pipeline_mode<synchronous>, transform_indices = @transform_10, window_bounds = array<i64: 32, 4>}, {pipeline_mode = #tpu.pipeline_mode<synchronous>, transform_indices = @transform_11, window_bounds = array<i64: 1, 4>}, {transform_indices = @transform_12, window_bounds = array<i64: 8, 4>}, {transform_indices = @transform_13, window_bounds = array<i64: 8, 1>}]} {
    %c0 = arith.constant 0 : index
    %c0_0 = arith.constant 0 : index
    %0 = vector.load %arg1[%c0, %c0_0] : memref<8x4xbf16, #tpu.memory_space<vmem>>, vector<8x4xbf16>
    %c0_1 = arith.constant 0 : index
    %c0_2 = arith.constant 0 : index
    %1 = vector.load %arg4[%c0_1, %c0_2] : memref<4x32xbf16, #tpu.memory_space<vmem>>, vector<4x32xbf16>
    %cst = arith.constant dense<0.000000e+00> : vector<8x32xf32>
    %2 = tpu.matmul %0, %1, %cst {dimension_numbers = #tpu.dot_dimension_numbers<[1], [0], [0], [1], [0, 0, 1, 1], [], []>} : vector<8x4xbf16>, vector<4x32xbf16>, vector<8x32xf32> -> vector<8x32xf32>
    %c0_3 = arith.constant 0 : index
    %c0_4 = arith.constant 0 : index
    %3 = vector.load %arg2[%c0_3, %c0_4] : memref<8x4xbf16, #tpu.memory_space<vmem>>, vector<8x4xbf16>
    %c0_5 = arith.constant 0 : index
    %c0_6 = arith.constant 0 : index
    %4 = vector.load %arg5[%c0_5, %c0_6] : memref<4x32xbf16, #tpu.memory_space<vmem>>, vector<4x32xbf16>
    %cst_7 = arith.constant dense<0.000000e+00> : vector<8x32xf32>
    %5 = tpu.matmul %3, %4, %cst_7 {dimension_numbers = #tpu.dot_dimension_numbers<[1], [0], [0], [1], [0, 0, 1, 1], [], []>} : vector<8x4xbf16>, vector<4x32xbf16>, vector<8x32xf32> -> vector<8x32xf32>
    %6 = arith.addf %2, %5 : vector<8x32xf32>
    %c0_8 = arith.constant 0 : index
    %c0_9 = arith.constant 0 : index
    %7 = vector.load %arg6[%c0_8, %c0_9] : memref<1x32xf32, #tpu.memory_space<vmem>>, vector<1x32xf32>
    %8 = vector.broadcast %7 : vector<1x32xf32> to vector<8x32xf32>
    %9 = arith.addf %6, %8 : vector<8x32xf32>
    %cst_10 = arith.constant 0.000000e+00 : f32
    %10 = vector.broadcast %cst_10 : f32 to vector<8x32xf32>
    %11 = arith.maximumf %9, %10 : vector<8x32xf32>
    %12 = arith.truncf %11 : vector<8x32xf32> to vector<8x32xbf16>
    %c0_11 = arith.constant 0 : index
    %c0_12 = arith.constant 0 : index
    %13 = vector.load %arg7[%c0_11, %c0_12] : memref<32x32xbf16, #tpu.memory_space<vmem>>, vector<32x32xbf16>
    %cst_13 = arith.constant dense<0.000000e+00> : vector<8x32xf32>
    %14 = tpu.matmul %12, %13, %cst_13 {dimension_numbers = #tpu.dot_dimension_numbers<[1], [0], [0], [1], [0, 0, 1, 1], [], []>} : vector<8x32xbf16>, vector<32x32xbf16>, vector<8x32xf32> -> vector<8x32xf32>
    %c0_14 = arith.constant 0 : index
    %c0_15 = arith.constant 0 : index
    %15 = vector.load %arg8[%c0_14, %c0_15] : memref<1x32xf32, #tpu.memory_space<vmem>>, vector<1x32xf32>
    %16 = vector.broadcast %15 : vector<1x32xf32> to vector<8x32xf32>
    %17 = arith.addf %14, %16 : vector<8x32xf32>
    %cst_16 = arith.constant 0.000000e+00 : f32
    %18 = vector.broadcast %cst_16 : f32 to vector<8x32xf32>
    %19 = arith.maximumf %17, %18 : vector<8x32xf32>
    %20 = arith.truncf %19 : vector<8x32xf32> to vector<8x32xbf16>
    %c0_17 = arith.constant 0 : index
    %c0_18 = arith.constant 0 : index
    %21 = vector.load %arg9[%c0_17, %c0_18] : memref<32x4xbf16, #tpu.memory_space<vmem>>, vector<32x4xbf16>
    %cst_19 = arith.constant dense<0.000000e+00> : vector<8x4xf32>
    %22 = tpu.matmul %20, %21, %cst_19 {dimension_numbers = #tpu.dot_dimension_numbers<[1], [0], [0], [1], [0, 0, 1, 1], [], []>} : vector<8x32xbf16>, vector<32x4xbf16>, vector<8x4xf32> -> vector<8x4xf32>
    %c0_20 = arith.constant 0 : index
    %c0_21 = arith.constant 0 : index
    %23 = vector.load %arg10[%c0_20, %c0_21] : memref<1x4xf32, #tpu.memory_space<vmem>>, vector<1x4xf32>
    %24 = vector.broadcast %23 : vector<1x4xf32> to vector<8x4xf32>
    %25 = arith.addf %22, %24 : vector<8x4xf32>
    %26 = math.tanh %25 : vector<8x4xf32>
    %c0_22 = arith.constant 0 : index
    %c0_23 = arith.constant 0 : index
    %27 = vector.load %arg11[%c0_22, %c0_23] : memref<32x4xbf16, #tpu.memory_space<vmem>>, vector<32x4xbf16>
    %cst_24 = arith.constant dense<0.000000e+00> : vector<8x4xf32>
    %28 = tpu.matmul %20, %27, %cst_24 {dimension_numbers = #tpu.dot_dimension_numbers<[1], [0], [0], [1], [0, 0, 1, 1], [], []>} : vector<8x32xbf16>, vector<32x4xbf16>, vector<8x4xf32> -> vector<8x4xf32>
    %c0_25 = arith.constant 0 : index
    %c0_26 = arith.constant 0 : index
    %29 = vector.load %arg12[%c0_25, %c0_26] : memref<1x4xf32, #tpu.memory_space<vmem>>, vector<1x4xf32>
    %30 = vector.broadcast %29 : vector<1x4xf32> to vector<8x4xf32>
    %31 = arith.addf %28, %30 : vector<8x4xf32>
    %c0_27 = arith.constant 0 : index
    %c0_28 = arith.constant 0 : index
    %32 = vector.load %arg3[%c0_27, %c0_28] : memref<8x4xf32, #tpu.memory_space<vmem>>, vector<8x4xf32>
    %33 = math.exp %26 : vector<8x4xf32>
    %34 = arith.mulf %32, %33 : vector<8x4xf32>
    %35 = arith.addf %34, %31 : vector<8x4xf32>
    %c0_29 = arith.constant 0 : index
    %c0_30 = arith.constant 0 : index
    %36 = vector.load %arg13[%c0_29, %c0_30] : memref<8x4xf32, #tpu.memory_space<vmem>>, vector<8x4xf32>
    tpu.vector_store %arg13[%c0_29, %c0_30], %35 {strides = array<i32>} : memref<8x4xf32, #tpu.memory_space<vmem>>, vector<8x4xf32>,
    %cst_31 = arith.constant dense<0.000000e+00> : vector<8xf32>
    %37 = vector.multi_reduction <add>, %26, %cst_31 [1] : vector<8x4xf32> to vector<8xf32>
    %38 = vector.shape_cast %37 : vector<8xf32> to vector<8x1xf32>
    %c0_32 = arith.constant 0 : index
    %c0_33 = arith.constant 0 : index
    %39 = vector.load %arg14[%c0_32, %c0_33] : memref<8x1xf32, #tpu.memory_space<vmem>>, vector<8x1xf32>
    tpu.vector_store %arg14[%c0_32, %c0_33], %38 {strides = array<i32>} : memref<8x1xf32, #tpu.memory_space<vmem>>, vector<8x1xf32>,
    return
  }
  func.func @transform_0(%arg0: i32) -> (i32, i32) {
    %c0_i32 = arith.constant 0 : i32
    %c0_i32_0 = arith.constant 0 : i32
    return %arg0, %c0_i32 : i32, i32
  }
  func.func @transform_1(%arg0: i32) -> (i32, i32) {
    %c0_i32 = arith.constant 0 : i32
    %c0_i32_0 = arith.constant 0 : i32
    return %arg0, %c0_i32 : i32, i32
  }
  func.func @transform_2(%arg0: i32) -> (i32, i32) {
    %c0_i32 = arith.constant 0 : i32
    %c0_i32_0 = arith.constant 0 : i32
    return %arg0, %c0_i32 : i32, i32
  }
  func.func @transform_3(%arg0: i32) -> (i32, i32) {
    %c0_i32 = arith.constant 0 : i32
    %c0_i32_0 = arith.constant 0 : i32
    %c0_i32_1 = arith.constant 0 : i32
    return %c0_i32, %c0_i32_0 : i32, i32
  }
  func.func @transform_4(%arg0: i32) -> (i32, i32) {
    %c0_i32 = arith.constant 0 : i32
    %c0_i32_0 = arith.constant 0 : i32
    %c0_i32_1 = arith.constant 0 : i32
    return %c0_i32, %c0_i32_0 : i32, i32
  }
  func.func @transform_5(%arg0: i32) -> (i32, i32) {
    %c0_i32 = arith.constant 0 : i32
    %c0_i32_0 = arith.constant 0 : i32
    %c0_i32_1 = arith.constant 0 : i32
    return %c0_i32, %c0_i32_0 : i32, i32
  }
  func.func @transform_6(%arg0: i32) -> (i32, i32) {
    %c0_i32 = arith.constant 0 : i32
    %c0_i32_0 = arith.constant 0 : i32
    %c0_i32_1 = arith.constant 0 : i32
    return %c0_i32, %c0_i32_0 : i32, i32
  }
  func.func @transform_7(%arg0: i32) -> (i32, i32) {
    %c0_i32 = arith.constant 0 : i32
    %c0_i32_0 = arith.constant 0 : i32
    %c0_i32_1 = arith.constant 0 : i32
    return %c0_i32, %c0_i32_0 : i32, i32
  }
  func.func @transform_8(%arg0: i32) -> (i32, i32) {
    %c0_i32 = arith.constant 0 : i32
    %c0_i32_0 = arith.constant 0 : i32
    %c0_i32_1 = arith.constant 0 : i32
    return %c0_i32, %c0_i32_0 : i32, i32
  }
  func.func @transform_9(%arg0: i32) -> (i32, i32) {
    %c0_i32 = arith.constant 0 : i32
    %c0_i32_0 = arith.constant 0 : i32
    %c0_i32_1 = arith.constant 0 : i32
    return %c0_i32, %c0_i32_0 : i32, i32
  }
  func.func @transform_10(%arg0: i32) -> (i32, i32) {
    %c0_i32 = arith.constant 0 : i32
    %c0_i32_0 = arith.constant 0 : i32
    %c0_i32_1 = arith.constant 0 : i32
    return %c0_i32, %c0_i32_0 : i32, i32
  }
  func.func @transform_11(%arg0: i32) -> (i32, i32) {
    %c0_i32 = arith.constant 0 : i32
    %c0_i32_0 = arith.constant 0 : i32
    %c0_i32_1 = arith.constant 0 : i32
    return %c0_i32, %c0_i32_0 : i32, i32
  }
  func.func @transform_12(%arg0: i32) -> (i32, i32) {
    %c0_i32 = arith.constant 0 : i32
    %c0_i32_0 = arith.constant 0 : i32
    return %arg0, %c0_i32 : i32, i32
  }
  func.func @transform_13(%arg0: i32) -> (i32, i32) {
    %c0_i32 = arith.constant 0 : i32
    %c0_i32_0 = arith.constant 0 : i32
    return %arg0, %c0_i32 : i32, i32
  }
}

module attributes {stable_mosaic.version = 11 : i64} {
  func.func @_coupling_kernel(%arg0: i32, %arg1: memref<8x4xbf16, #tpu.memory_space<vmem>>, %arg2: memref<8x4xbf16, #tpu.memory_space<vmem>>, %arg3: memref<8x4xf32, #tpu.memory_space<vmem>>, %arg4: memref<4x32xbf16, #tpu.memory_space<vmem>>, %arg5: memref<4x32xbf16, #tpu.memory_space<vmem>>, %arg6: memref<1x32xf32, #tpu.memory_space<vmem>>, %arg7: memref<32x32xbf16, #tpu.memory_space<vmem>>, %arg8: memref<1x32xf32, #tpu.memory_space<vmem>>, %arg9: memref<32x4xbf16, #tpu.memory_space<vmem>>, %arg10: memref<1x4xf32, #tpu.memory_space<vmem>>, %arg11: memref<32x4xbf16, #tpu.memory_space<vmem>>, %arg12: memref<1x4xf32, #tpu.memory_space<vmem>>, %arg13: memref<8x4xf32, #tpu.memory_space<vmem>>, %arg14: memref<8x1xf32, #tpu.memory_space<vmem>>) attributes {dimension_semantics = [#tpu.dimension_semantics<parallel>], iteration_bounds = array<i64: 1>, scalar_prefetch = 0 : i64, scratch_operands = 0 : i64, tpu.core_type = #tpu.core_type<tc>, window_params = [{transform_indices = @transform_0, window_bounds = array<i64: 8, 4>}, {transform_indices = @transform_1, window_bounds = array<i64: 8, 4>}, {transform_indices = @transform_2, window_bounds = array<i64: 8, 4>}, {pipeline_mode = #tpu.pipeline_mode<synchronous>, transform_indices = @transform_3, window_bounds = array<i64: 4, 32>}, {pipeline_mode = #tpu.pipeline_mode<synchronous>, transform_indices = @transform_4, window_bounds = array<i64: 4, 32>}, {pipeline_mode = #tpu.pipeline_mode<synchronous>, transform_indices = @transform_5, window_bounds = array<i64: 1, 32>}, {pipeline_mode = #tpu.pipeline_mode<synchronous>, transform_indices = @transform_6, window_bounds = array<i64: 32, 32>}, {pipeline_mode = #tpu.pipeline_mode<synchronous>, transform_indices = @transform_7, window_bounds = array<i64: 1, 32>}, {pipeline_mode = #tpu.pipeline_mode<synchronous>, transform_indices = @transform_8, window_bounds = array<i64: 32, 4>}, {pipeline_mode = #tpu.pipeline_mode<synchronous>, transform_indices = @transform_9, window_bounds = array<i64: 1, 4>}, {pipeline_mode = #tpu.pipeline_mode<synchronous>, transform_indices = @transform_10, window_bounds = array<i64: 32, 4>}, {pipeline_mode = #tpu.pipeline_mode<synchronous>, transform_indices = @transform_11, window_bounds = array<i64: 1, 4>}, {transform_indices = @transform_12, window_bounds = array<i64: 8, 4>}, {transform_indices = @transform_13, window_bounds = array<i64: 8, 1>}]} {
    %c0 = arith.constant 0 : index
    %c0_0 = arith.constant 0 : index
    %0 = vector.load %arg1[%c0, %c0_0] : memref<8x4xbf16, #tpu.memory_space<vmem>>, vector<8x4xbf16>
    %c0_1 = arith.constant 0 : index
    %c0_2 = arith.constant 0 : index
    %1 = vector.load %arg4[%c0_1, %c0_2] : memref<4x32xbf16, #tpu.memory_space<vmem>>, vector<4x32xbf16>
    %cst = arith.constant dense<0.000000e+00> : vector<8x32xf32>
    %2 = tpu.matmul %0, %1, %cst {dimension_numbers = #tpu.dot_dimension_numbers<[1], [0], [0], [1], [0, 0, 1, 1], [], []>} : vector<8x4xbf16>, vector<4x32xbf16>, vector<8x32xf32> -> vector<8x32xf32>
    %c0_3 = arith.constant 0 : index
    %c0_4 = arith.constant 0 : index
    %3 = vector.load %arg2[%c0_3, %c0_4] : memref<8x4xbf16, #tpu.memory_space<vmem>>, vector<8x4xbf16>
    %c0_5 = arith.constant 0 : index
    %c0_6 = arith.constant 0 : index
    %4 = vector.load %arg5[%c0_5, %c0_6] : memref<4x32xbf16, #tpu.memory_space<vmem>>, vector<4x32xbf16>
    %cst_7 = arith.constant dense<0.000000e+00> : vector<8x32xf32>
    %5 = tpu.matmul %3, %4, %cst_7 {dimension_numbers = #tpu.dot_dimension_numbers<[1], [0], [0], [1], [0, 0, 1, 1], [], []>} : vector<8x4xbf16>, vector<4x32xbf16>, vector<8x32xf32> -> vector<8x32xf32>
    %6 = arith.addf %2, %5 : vector<8x32xf32>
    %c0_8 = arith.constant 0 : index
    %c0_9 = arith.constant 0 : index
    %7 = vector.load %arg6[%c0_8, %c0_9] : memref<1x32xf32, #tpu.memory_space<vmem>>, vector<1x32xf32>
    %8 = vector.broadcast %7 : vector<1x32xf32> to vector<8x32xf32>
    %9 = arith.addf %6, %8 : vector<8x32xf32>
    %cst_10 = arith.constant 0.000000e+00 : f32
    %10 = vector.broadcast %cst_10 : f32 to vector<8x32xf32>
    %11 = arith.maximumf %9, %10 : vector<8x32xf32>
    %12 = arith.truncf %11 : vector<8x32xf32> to vector<8x32xbf16>
    %c0_11 = arith.constant 0 : index
    %c0_12 = arith.constant 0 : index
    %13 = vector.load %arg7[%c0_11, %c0_12] : memref<32x32xbf16, #tpu.memory_space<vmem>>, vector<32x32xbf16>
    %cst_13 = arith.constant dense<0.000000e+00> : vector<8x32xf32>
    %14 = tpu.matmul %12, %13, %cst_13 {dimension_numbers = #tpu.dot_dimension_numbers<[1], [0], [0], [1], [0, 0, 1, 1], [], []>} : vector<8x32xbf16>, vector<32x32xbf16>, vector<8x32xf32> -> vector<8x32xf32>
    %c0_14 = arith.constant 0 : index
    %c0_15 = arith.constant 0 : index
    %15 = vector.load %arg8[%c0_14, %c0_15] : memref<1x32xf32, #tpu.memory_space<vmem>>, vector<1x32xf32>
    %16 = vector.broadcast %15 : vector<1x32xf32> to vector<8x32xf32>
    %17 = arith.addf %14, %16 : vector<8x32xf32>
    %cst_16 = arith.constant 0.000000e+00 : f32
    %18 = vector.broadcast %cst_16 : f32 to vector<8x32xf32>
    %19 = arith.maximumf %17, %18 : vector<8x32xf32>
    %20 = arith.truncf %19 : vector<8x32xf32> to vector<8x32xbf16>
    %c0_17 = arith.constant 0 : index
    %c0_18 = arith.constant 0 : index
    %21 = vector.load %arg9[%c0_17, %c0_18] : memref<32x4xbf16, #tpu.memory_space<vmem>>, vector<32x4xbf16>
    %cst_19 = arith.constant dense<0.000000e+00> : vector<8x4xf32>
    %22 = tpu.matmul %20, %21, %cst_19 {dimension_numbers = #tpu.dot_dimension_numbers<[1], [0], [0], [1], [0, 0, 1, 1], [], []>} : vector<8x32xbf16>, vector<32x4xbf16>, vector<8x4xf32> -> vector<8x4xf32>
    %c0_20 = arith.constant 0 : index
    %c0_21 = arith.constant 0 : index
    %23 = vector.load %arg10[%c0_20, %c0_21] : memref<1x4xf32, #tpu.memory_space<vmem>>, vector<1x4xf32>
    %24 = vector.broadcast %23 : vector<1x4xf32> to vector<8x4xf32>
    %25 = arith.addf %22, %24 : vector<8x4xf32>
    %26 = math.tanh %25 : vector<8x4xf32>
    %c0_22 = arith.constant 0 : index
    %c0_23 = arith.constant 0 : index
    %27 = vector.load %arg11[%c0_22, %c0_23] : memref<32x4xbf16, #tpu.memory_space<vmem>>, vector<32x4xbf16>
    %cst_24 = arith.constant dense<0.000000e+00> : vector<8x4xf32>
    %28 = tpu.matmul %20, %27, %cst_24 {dimension_numbers = #tpu.dot_dimension_numbers<[1], [0], [0], [1], [0, 0, 1, 1], [], []>} : vector<8x32xbf16>, vector<32x4xbf16>, vector<8x4xf32> -> vector<8x4xf32>
    %c0_25 = arith.constant 0 : index
    %c0_26 = arith.constant 0 : index
    %29 = vector.load %arg12[%c0_25, %c0_26] : memref<1x4xf32, #tpu.memory_space<vmem>>, vector<1x4xf32>
    %30 = vector.broadcast %29 : vector<1x4xf32> to vector<8x4xf32>
    %31 = arith.addf %28, %30 : vector<8x4xf32>
    %c0_27 = arith.constant 0 : index
    %c0_28 = arith.constant 0 : index
    %32 = vector.load %arg3[%c0_27, %c0_28] : memref<8x4xf32, #tpu.memory_space<vmem>>, vector<8x4xf32>
    %33 = math.exp %26 : vector<8x4xf32>
    %34 = arith.mulf %32, %33 : vector<8x4xf32>
    %35 = arith.addf %34, %31 : vector<8x4xf32>
    %c0_29 = arith.constant 0 : index
    %c0_30 = arith.constant 0 : index
    %36 = vector.load %arg13[%c0_29, %c0_30] : memref<8x4xf32, #tpu.memory_space<vmem>>, vector<8x4xf32>
    tpu.vector_store %arg13[%c0_29, %c0_30], %35 {strides = array<i32>} : memref<8x4xf32, #tpu.memory_space<vmem>>, vector<8x4xf32>,
    %cst_31 = arith.constant dense<0.000000e+00> : vector<8xf32>
    %37 = vector.multi_reduction <add>, %26, %cst_31 [1] : vector<8x4xf32> to vector<8xf32>
    %38 = vector.shape_cast %37 : vector<8xf32> to vector<8x1xf32>
    %c0_32 = arith.constant 0 : index
    %c0_33 = arith.constant 0 : index
    %39 = vector.load %arg14[%c0_32, %c0_33] : memref<8x1xf32, #tpu.memory_space<vmem>>, vector<8x1xf32>
    tpu.vector_store %arg14[%c0_32, %c0_33], %38 {strides = array<i32>} : memref<8x1xf32, #tpu.memory_space<vmem>>, vector<8x1xf32>,
    return
  }
  func.func @transform_0(%arg0: i32) -> (i32, i32) {
    %c0_i32 = arith.constant 0 : i32
    %c0_i32_0 = arith.constant 0 : i32
    return %arg0, %c0_i32 : i32, i32
  }
  func.func @transform_1(%arg0: i32) -> (i32, i32) {
    %c0_i32 = arith.constant 0 : i32
    %c0_i32_0 = arith.constant 0 : i32
    return %arg0, %c0_i32 : i32, i32
  }
  func.func @transform_2(%arg0: i32) -> (i32, i32) {
    %c0_i32 = arith.constant 0 : i32
    %c0_i32_0 = arith.constant 0 : i32
    return %arg0, %c0_i32 : i32, i32
  }
  func.func @transform_3(%arg0: i32) -> (i32, i32) {
    %c0_i32 = arith.constant 0 : i32
    %c0_i32_0 = arith.constant 0 : i32
    %c0_i32_1 = arith.constant 0 : i32
    return %c0_i32, %c0_i32_0 : i32, i32
  }
  func.func @transform_4(%arg0: i32) -> (i32, i32) {
    %c0_i32 = arith.constant 0 : i32
    %c0_i32_0 = arith.constant 0 : i32
    %c0_i32_1 = arith.constant 0 : i32
    return %c0_i32, %c0_i32_0 : i32, i32
  }
  func.func @transform_5(%arg0: i32) -> (i32, i32) {
    %c0_i32 = arith.constant 0 : i32
    %c0_i32_0 = arith.constant 0 : i32
    %c0_i32_1 = arith.constant 0 : i32
    return %c0_i32, %c0_i32_0 : i32, i32
  }
  func.func @transform_6(%arg0: i32) -> (i32, i32) {
    %c0_i32 = arith.constant 0 : i32
    %c0_i32_0 = arith.constant 0 : i32
    %c0_i32_1 = arith.constant 0 : i32
    return %c0_i32, %c0_i32_0 : i32, i32
  }
  func.func @transform_7(%arg0: i32) -> (i32, i32) {
    %c0_i32 = arith.constant 0 : i32
    %c0_i32_0 = arith.constant 0 : i32
    %c0_i32_1 = arith.constant 0 : i32
    return %c0_i32, %c0_i32_0 : i32, i32
  }
  func.func @transform_8(%arg0: i32) -> (i32, i32) {
    %c0_i32 = arith.constant 0 : i32
    %c0_i32_0 = arith.constant 0 : i32
    %c0_i32_1 = arith.constant 0 : i32
    return %c0_i32, %c0_i32_0 : i32, i32
  }
  func.func @transform_9(%arg0: i32) -> (i32, i32) {
    %c0_i32 = arith.constant 0 : i32
    %c0_i32_0 = arith.constant 0 : i32
    %c0_i32_1 = arith.constant 0 : i32
    return %c0_i32, %c0_i32_0 : i32, i32
  }
  func.func @transform_10(%arg0: i32) -> (i32, i32) {
    %c0_i32 = arith.constant 0 : i32
    %c0_i32_0 = arith.constant 0 : i32
    %c0_i32_1 = arith.constant 0 : i32
    return %c0_i32, %c0_i32_0 : i32, i32
  }
  func.func @transform_11(%arg0: i32) -> (i32, i32) {
    %c0_i32 = arith.constant 0 : i32
    %c0_i32_0 = arith.constant 0 : i32
    %c0_i32_1 = arith.constant 0 : i32
    return %c0_i32, %c0_i32_0 : i32, i32
  }
  func.func @transform_12(%arg0: i32) -> (i32, i32) {
    %c0_i32 = arith.constant 0 : i32
    %c0_i32_0 = arith.constant 0 : i32
    return %arg0, %c0_i32 : i32, i32
  }
  func.func @transform_13(%arg0: i32) -> (i32, i32) {
    %c0_i32 = arith.constant 0 : i32
    %c0_i32_0 = arith.constant 0 : i32
    return %arg0, %c0_i32 : i32, i32
  }
}

</mosaic_0001>

<llo_original>
// kernel: tpu_custom_call.1
$region0: #{tpu_custom_call.1}
  #allocation0 [shape = 'u32[]', space=smem, size = 0x4, offset = 0x4, fixed_abs, tag = 'smem constant byte address 0x4 - core index']
  #allocation1 [shape = 'u32[72,128]{1,0:T(1,128)}', space=vmem, size = 0x9000, scoped, tag = 'internal scratch']
  %s0 = inlined_call_operand.vmem [shape: bf16[8,4], index: 0, kind: input, shape index: {}]
  %s1 = inlined_call_operand.vmem [shape: bf16[8,4], index: 1, kind: input, shape index: {}]
  %s2 = inlined_call_operand.vmem [shape: f32[8,4], index: 2, kind: input, shape index: {}]
  %s3 = inlined_call_operand.vmem [shape: bf16[4,32], index: 3, kind: input, shape index: {}]
  %s4 = inlined_call_operand.vmem [shape: bf16[4,32], index: 4, kind: input, shape index: {}]
  %s5 = inlined_call_operand.vmem [shape: f32[1,32], index: 5, kind: input, shape index: {}]
  %s6 = inlined_call_operand.vmem [shape: bf16[32,32], index: 6, kind: input, shape index: {}]
  %s7 = inlined_call_operand.vmem [shape: f32[1,32], index: 7, kind: input, shape index: {}]
  %s8 = inlined_call_operand.vmem [shape: bf16[32,4], index: 8, kind: input, shape index: {}]
  %s9 = inlined_call_operand.vmem [shape: f32[1,4], index: 9, kind: input, shape index: {}]
  %s10 = inlined_call_operand.vmem [shape: bf16[32,4], index: 10, kind: input, shape index: {}]
  %s11 = inlined_call_operand.vmem [shape: f32[1,4], index: 11, kind: input, shape index: {}]
  %s12 = inlined_call_operand.vmem [shape: f32[8,4], index: 12, kind: output, shape index: {0}]
  %s13 = inlined_call_operand.vmem [shape: f32[8,1], index: 13, kind: output, shape index: {1}]
  %14 = xla_tuple %s12, %s13
  %s15 = sld [smem:[#allocation0]]
  $region66: #{tpu_custom_call.1} parent=0
    _
  %s17 = ssub.s32 1, %s15
  %s18 = scalar_select 0, %s17, %s15
  // Predicated region
  $region2: #{tpu_custom_call.1} parent=0 // pred_check
    _
  $region3: #{tpu_custom_call.1} parent=0 // pred_check_branch
    %20 = sbr.rel (0) target = $region5
  $region4: #{tpu_custom_call.1} parent=0 // pred_region
    _
  $region5: #{tpu_custom_call.1} parent=0 // pred_fallthru
    _
  // Predicated region
  $region6: #{tpu_custom_call.1} parent=0 // pred_check
    _
  $region7: #{tpu_custom_call.1} parent=0 // pred_check_branch
    %22 = sbr.rel (0) target = $region9
  $region8: #{tpu_custom_call.1} parent=0 // pred_region
    _
  $region9: #{tpu_custom_call.1} parent=0 // pred_fallthru
    _
  // Predicated region
  $region10: #{tpu_custom_call.1} parent=0 // pred_check
    _
  $region11: #{tpu_custom_call.1} parent=0 // pred_check_branch
    %24 = sbr.rel (0) target = $region13
  $region12: #{tpu_custom_call.1} parent=0 // pred_region
    _
  $region13: #{tpu_custom_call.1} parent=0 // pred_fallthru
    _
  // Predicated region
  $region14: #{tpu_custom_call.1} parent=0 // pred_check
    _
  $region15: #{tpu_custom_call.1} parent=0 // pred_check_branch
    %26 = sbr.rel (0) target = $region17
  $region16: #{tpu_custom_call.1} parent=0 // pred_region
    _
  $region17: #{tpu_custom_call.1} parent=0 // pred_fallthru
    _
  // Predicated region
  $region18: #{tpu_custom_call.1} parent=0 // pred_check
    _
  $region19: #{tpu_custom_call.1} parent=0 // pred_check_branch
    %28 = sbr.rel (0) target = $region21
  $region20: #{tpu_custom_call.1} parent=0 // pred_region
    _
  $region21: #{tpu_custom_call.1} parent=0 // pred_fallthru
    _
  // Predicated region
  $region22: #{tpu_custom_call.1} parent=0 // pred_check
    _
  $region23: #{tpu_custom_call.1} parent=0 // pred_check_branch
    %30 = sbr.rel (0) target = $region25
  $region24: #{tpu_custom_call.1} parent=0 // pred_region
    _
  $region25: #{tpu_custom_call.1} parent=0 // pred_fallthru
    _
  // Predicated region
  $region26: #{tpu_custom_call.1} parent=0 // pred_check
    _
  $region27: #{tpu_custom_call.1} parent=0 // pred_check_branch
    %32 = sbr.rel (0) target = $region29
  $region28: #{tpu_custom_call.1} parent=0 // pred_region
    _
  $region29: #{tpu_custom_call.1} parent=0 // pred_fallthru
    _
  // Predicated region
  $region30: #{tpu_custom_call.1} parent=0 // pred_check
    _
  $region31: #{tpu_custom_call.1} parent=0 // pred_check_branch
    %34 = sbr.rel (0) target = $region33
  $region32: #{tpu_custom_call.1} parent=0 // pred_region
    _
  $region33: #{tpu_custom_call.1} parent=0 // pred_fallthru
    _
  // Predicated region
  $region34: #{tpu_custom_call.1} parent=0 // pred_check
    _
  $region35: #{tpu_custom_call.1} parent=0 // pred_check_branch
    %36 = sbr.rel (0) target = $region37
  $region36: #{tpu_custom_call.1} parent=0 // pred_region
    _
  $region37: #{tpu_custom_call.1} parent=0 // pred_fallthru
    _
  // Predicated region
  $region38: #{tpu_custom_call.1} parent=0 // pred_check
    _
  $region39: #{tpu_custom_call.1} parent=0 // pred_check_branch
    %38 = sbr.rel (0) target = $region41
  $region40: #{tpu_custom_call.1} parent=0 // pred_region
    _
  $region41: #{tpu_custom_call.1} parent=0 // pred_fallthru
    _
  // Predicated region
  $region42: #{tpu_custom_call.1} parent=0 // pred_check
    _
  $region43: #{tpu_custom_call.1} parent=0 // pred_check_branch
    %40 = sbr.rel (0) target = $region45
  $region44: #{tpu_custom_call.1} parent=0 // pred_region
    _
  $region45: #{tpu_custom_call.1} parent=0 // pred_fallthru
    _
  // Predicated region
  $region46: #{tpu_custom_call.1} parent=0 // pred_check
    _
  $region47: #{tpu_custom_call.1} parent=0 // pred_check_branch
    %42 = sbr.rel (0) target = $region49
  $region48: #{tpu_custom_call.1} parent=0 // pred_region
    _
  $region49: #{tpu_custom_call.1} parent=0 // pred_fallthru
    _
  %v44 = vld [vmem:[%s0] sm:$0xf]
  %v45 = vld [vmem:[%s3] sm:$0x3]
  %v46 = vld [vmem:[%s1] sm:$0xf]
  %v47 = vld [vmem:[%s4] sm:$0x3]
  %vm48 = vcmask 31744
  %v50 = vsel %vm48, %v46, 0
  %vm52 = vcmask 1041408
  %v54 = vsel %vm52, %v47, 0
  %56 = vmatpush.bf16.msra.mxu0 0
  %57 = vmatpush.bf16.msra.mxu0 0
  %58 = vmatpush.bf16.msra.mxu0 0
  %59 = vmatpush.bf16.msra.mxu0 0
  %60 = vmatpush.bf16.msra.mxu0 0
  %61 = vmatpush.bf16.msra.mxu0 0
  %62 = vmatpush.bf16.msra.mxu0 0
  %63 = vmatpush.bf16.msra.mxu0 %v54
  %64 = vmatmul.bf16.gmra.mxu0 %v50
  %v65 = vpop.f32.mrf.mxu0
  %v66 = vadd.f32 0.0, %v65
  %v67 = vpop.f32.mrf.mxu0
  %68 = vdwg.mxu0
  %v70 = vsel %vm48, %v44, 0
  %v73 = vsel %vm52, %v45, 0
  %75 = vmatpush.bf16.msra.mxu0 0
  %76 = vmatpush.bf16.msra.mxu0 0
  %77 = vmatpush.bf16.msra.mxu0 0
  %78 = vmatpush.bf16.msra.mxu0 0
  %79 = vmatpush.bf16.msra.mxu0 0
  %80 = vmatpush.bf16.msra.mxu0 0
  %81 = vmatpush.bf16.msra.mxu0 0
  %82 = vmatpush.bf16.msra.mxu0 %v73
  %83 = vmatmul.bf16.gmra.mxu0 %v70
  %v84 = vpop.f32.mrf.mxu0
  %v85 = vadd.f32 %v66, %v84
  %v86 = vpop.f32.mrf.mxu0
  %87 = vdwg.mxu0
  %v88 = vld [vmem:[%s5] sm:$0x1]
  %v90 = vperm.slane %v88, 0
  %v92 = vadd.f32 %v85, %v90
  %v93 = vmax.f32 %v92, 0.0
  %v94 = vpack.c.bf16 %v93, %v93
  %v95 = vld [vmem:[%s6] sm:$0xf]
  %v96 = vld [vmem:[%s6 + $0x4] sm:$0xf]
  %v97 = vld [vmem:[%s6 + $0x8] sm:$0xf]
  %v98 = vld [vmem:[%s6 + $0xc] sm:$0xf]
  %v99 = vld [vmem:[%s7] sm:$0x1]
  %v101 = vperm.slane %v99, 0
  %v107 = vunpack.c.l.b16 %v95
  %v108 = vunpack.c.l.b16 %v96
  %v109 = vunpack.c.l.b16 %v97
  %v110 = vunpack.c.l.b16 %v98
  %v111 = vpack.c.b16 %v108, %v107
  %v112 = vpack.c.b16 %v110, %v109
  %vm115 = vcmask 261120
  %v117 = vsel %vm115, %v94, 0
  %119 = vmatpush.bf16.msra.mxu0 0
  %120 = vmatpush.bf16.msra.mxu0 0
  %121 = vmatpush.bf16.msra.mxu0 0
  %122 = vmatpush.bf16.msra.mxu0 0
  %123 = vmatpush.bf16.msra.mxu0 0
  %124 = vmatpush.bf16.msra.mxu0 0
  %125 = vmatpush.bf16.msra.mxu0 %v112
  %126 = vmatpush.bf16.msra.mxu0 %v111
  %127 = vmatmul.bf16.gmra.mxu0 %v117
  %v128 = vpop.f32.mrf.mxu0
  %v129 = vadd.f32 %v101, %v128
  %v130 = vpop.f32.mrf.mxu0
  %131 = vdwg.mxu0
  %v132 = vmax.f32 %v129, 0.0
  %v133 = vpack.c.bf16 %v132, %v132
  %v134 = vld [vmem:[%s8] sm:$0xf]
  %v135 = vld [vmem:[%s8 + $0x4] sm:$0xf]
  %v136 = vld [vmem:[%s8 + $0x8] sm:$0xf]
  %v137 = vld [vmem:[%s8 + $0xc] sm:$0xf]
  %v138 = vld [vmem:[%s9] sm:$0x1]
  %v140 = vperm.slane %v138, 0
  %v146 = vunpack.c.l.b16 %v134
  %v147 = vunpack.c.l.b16 %v135
  %v148 = vunpack.c.l.b16 %v136
  %v149 = vunpack.c.l.b16 %v137
  %v150 = vpack.c.b16 %v147, %v146
  %v151 = vpack.c.b16 %v149, %v148
  %v155 = vsel %vm115, %v133, 0
  %157 = vmatpush.bf16.msra.mxu0 0
  %158 = vmatpush.bf16.msra.mxu0 0
  %159 = vmatpush.bf16.msra.mxu0 0
  %160 = vmatpush.bf16.msra.mxu0 0
  %161 = vmatpush.bf16.msra.mxu0 0
  %162 = vmatpush.bf16.msra.mxu0 0
  %163 = vmatpush.bf16.msra.mxu0 %v151
  %164 = vmatpush.bf16.msra.mxu0 %v150
  %165 = vmatmul.bf16.gmra.mxu0 %v155
  %v166 = vpop.f32.mrf.mxu0
  %v167 = vadd.f32 %v140, %v166
  %v168 = vpop.f32.mrf.mxu0
  %169 = vdwg.mxu0
  %v170 = vtanh.pop %v167
  %v171 = vld [vmem:[%s10] sm:$0xf]
  %v172 = vld [vmem:[%s10 + $0x4] sm:$0xf]
  %v173 = vld [vmem:[%s10 + $0x8] sm:$0xf]
  %v174 = vld [vmem:[%s10 + $0xc] sm:$0xf]
  %v175 = vld [vmem:[%s11] sm:$0x1]
  %v177 = vperm.slane %v175, 0
  %v183 = vunpack.c.l.b16 %v171
  %v184 = vunpack.c.l.b16 %v172
  %v185 = vunpack.c.l.b16 %v173
  %v186 = vunpack.c.l.b16 %v174
  %v187 = vpack.c.b16 %v184, %v183
  %v188 = vpack.c.b16 %v186, %v185
  %191 = vmatpush.bf16.msra.mxu0 0
  %192 = vmatpush.bf16.msra.mxu0 0
  %193 = vmatpush.bf16.msra.mxu0 0
  %194 = vmatpush.bf16.msra.mxu0 0
  %195 = vmatpush.bf16.msra.mxu0 0
  %196 = vmatpush.bf16.msra.mxu0 0
  %197 = vmatpush.bf16.msra.mxu0 %v188
  %198 = vmatpush.bf16.msra.mxu0 %v187
  %199 = vmatmul.bf16.gmra.mxu0 %v155
  %v200 = vpop.f32.mrf.mxu0
  %v201 = vadd.f32 %v177, %v200
  %v202 = vpop.f32.mrf.mxu0
  %203 = vdwg.mxu0
  %v204 = vld [vmem:[%s2] sm:$0xff]
  %v205 = vmul.f32 %v170, 1.442695
  %v206 = vpow.pop %v205
  %v207 = vmul.f32 %v204, %v206
  %v208 = vadd.f32 %v207, %v201
  %209 = vst.msk [vmem:[%s12] sm:$0xff] %vm48, %v208
  %v210 = vsel %vm48, %v170, 0.0
  %211 = vadd.xlane.f32.xlu0 %v210
  %v212 = vpop.xlane.xlu0 %211
  %vm213 = vcmask 7168
  %214 = vst.msk [vmem:[%s13] sm:$0xff] %vm213, %v212
  // Predicated region
  $region50: #{tpu_custom_call.1} parent=0 // pred_check
    _
  $region51: #{tpu_custom_call.1} parent=0 // pred_check_branch
    %216 = sbr.rel (0) target = $region53
  $region52: #{tpu_custom_call.1} parent=0 // pred_region
    _
  $region53: #{tpu_custom_call.1} parent=0 // pred_fallthru
    _
  // Predicated region
  $region54: #{tpu_custom_call.1} parent=0 // pred_check
    _
  $region55: #{tpu_custom_call.1} parent=0 // pred_check_branch
    %218 = sbr.rel (0) target = $region57
  $region56: #{tpu_custom_call.1} parent=0 // pred_region
    _
  $region57: #{tpu_custom_call.1} parent=0 // pred_fallthru
    _
  // Predicated region
  $region58: #{tpu_custom_call.1} parent=0 // pred_check
    _
  $region59: #{tpu_custom_call.1} parent=0 // pred_check_branch
    %220 = sbr.rel (0) target = $region61
  $region60: #{tpu_custom_call.1} parent=0 // pred_region
    _
  $region61: #{tpu_custom_call.1} parent=0 // pred_fallthru
    _
  // Predicated region
  $region62: #{tpu_custom_call.1} parent=0 // pred_check
    _
  $region63: #{tpu_custom_call.1} parent=0 // pred_check_branch
    %222 = sbr.rel (0) target = $region65
  $region64: #{tpu_custom_call.1} parent=0 // pred_region
    _
  $region65: #{tpu_custom_call.1} parent=0 // pred_fallthru
    _

// kernel: tpu_custom_call.1
$region0: #{tpu_custom_call.1}
  #allocation0 [shape = 'u32[]', space=smem, size = 0x4, offset = 0x4, fixed_abs, tag = 'smem constant byte address 0x4 - core index']
  #allocation1 [shape = 'u32[72,128]{1,0:T(1,128)}', space=vmem, size = 0x9000, scoped, tag = 'internal scratch']
  %s0 = inlined_call_operand.vmem [shape: bf16[8,4], index: 0, kind: input, shape index: {}]
  %s1 = inlined_call_operand.vmem [shape: bf16[8,4], index: 1, kind: input, shape index: {}]
  %s2 = inlined_call_operand.vmem [shape: f32[8,4], index: 2, kind: input, shape index: {}]
  %s3 = inlined_call_operand.vmem [shape: bf16[4,32], index: 3, kind: input, shape index: {}]
  %s4 = inlined_call_operand.vmem [shape: bf16[4,32], index: 4, kind: input, shape index: {}]
  %s5 = inlined_call_operand.vmem [shape: f32[1,32], index: 5, kind: input, shape index: {}]
  %s6 = inlined_call_operand.vmem [shape: bf16[32,32], index: 6, kind: input, shape index: {}]
  %s7 = inlined_call_operand.vmem [shape: f32[1,32], index: 7, kind: input, shape index: {}]
  %s8 = inlined_call_operand.vmem [shape: bf16[32,4], index: 8, kind: input, shape index: {}]
  %s9 = inlined_call_operand.vmem [shape: f32[1,4], index: 9, kind: input, shape index: {}]
  %s10 = inlined_call_operand.vmem [shape: bf16[32,4], index: 10, kind: input, shape index: {}]
  %s11 = inlined_call_operand.vmem [shape: f32[1,4], index: 11, kind: input, shape index: {}]
  %s12 = inlined_call_operand.vmem [shape: f32[8,4], index: 12, kind: output, shape index: {0}]
  %s13 = inlined_call_operand.vmem [shape: f32[8,1], index: 13, kind: output, shape index: {1}]
  %14 = xla_tuple %s12, %s13
  %s15 = sld [smem:[#allocation0]]
  $region66: #{tpu_custom_call.1} parent=0
    _
  %s17 = ssub.s32 1, %s15
  %s18 = scalar_select 0, %s17, %s15
  // Predicated region
  $region2: #{tpu_custom_call.1} parent=0 // pred_check
    _
  $region3: #{tpu_custom_call.1} parent=0 // pred_check_branch
    %20 = sbr.rel (0) target = $region5
  $region4: #{tpu_custom_call.1} parent=0 // pred_region
    _
  $region5: #{tpu_custom_call.1} parent=0 // pred_fallthru
    _
  // Predicated region
  $region6: #{tpu_custom_call.1} parent=0 // pred_check
    _
  $region7: #{tpu_custom_call.1} parent=0 // pred_check_branch
    %22 = sbr.rel (0) target = $region9
  $region8: #{tpu_custom_call.1} parent=0 // pred_region
    _
  $region9: #{tpu_custom_call.1} parent=0 // pred_fallthru
    _
  // Predicated region
  $region10: #{tpu_custom_call.1} parent=0 // pred_check
    _
  $region11: #{tpu_custom_call.1} parent=0 // pred_check_branch
    %24 = sbr.rel (0) target = $region13
  $region12: #{tpu_custom_call.1} parent=0 // pred_region
    _
  $region13: #{tpu_custom_call.1} parent=0 // pred_fallthru
    _
  // Predicated region
  $region14: #{tpu_custom_call.1} parent=0 // pred_check
    _
  $region15: #{tpu_custom_call.1} parent=0 // pred_check_branch
    %26 = sbr.rel (0) target = $region17
  $region16: #{tpu_custom_call.1} parent=0 // pred_region
    _
  $region17: #{tpu_custom_call.1} parent=0 // pred_fallthru
    _
  // Predicated region
  $region18: #{tpu_custom_call.1} parent=0 // pred_check
    _
  $region19: #{tpu_custom_call.1} parent=0 // pred_check_branch
    %28 = sbr.rel (0) target = $region21
  $region20: #{tpu_custom_call.1} parent=0 // pred_region
    _
  $region21: #{tpu_custom_call.1} parent=0 // pred_fallthru
    _
  // Predicated region
  $region22: #{tpu_custom_call.1} parent=0 // pred_check
    _
  $region23: #{tpu_custom_call.1} parent=0 // pred_check_branch
    %30 = sbr.rel (0) target = $region25
  $region24: #{tpu_custom_call.1} parent=0 // pred_region
    _
  $region25: #{tpu_custom_call.1} parent=0 // pred_fallthru
    _
  // Predicated region
  $region26: #{tpu_custom_call.1} parent=0 // pred_check
    _
  $region27: #{tpu_custom_call.1} parent=0 // pred_check_branch
    %32 = sbr.rel (0) target = $region29
  $region28: #{tpu_custom_call.1} parent=0 // pred_region
    _
  $region29: #{tpu_custom_call.1} parent=0 // pred_fallthru
    _
  // Predicated region
  $region30: #{tpu_custom_call.1} parent=0 // pred_check
    _
  $region31: #{tpu_custom_call.1} parent=0 // pred_check_branch
    %34 = sbr.rel (0) target = $region33
  $region32: #{tpu_custom_call.1} parent=0 // pred_region
    _
  $region33: #{tpu_custom_call.1} parent=0 // pred_fallthru
    _
  // Predicated region
  $region34: #{tpu_custom_call.1} parent=0 // pred_check
    _
  $region35: #{tpu_custom_call.1} parent=0 // pred_check_branch
    %36 = sbr.rel (0) target = $region37
  $region36: #{tpu_custom_call.1} parent=0 // pred_region
    _
  $region37: #{tpu_custom_call.1} parent=0 // pred_fallthru
    _
  // Predicated region
  $region38: #{tpu_custom_call.1} parent=0 // pred_check
    _
  $region39: #{tpu_custom_call.1} parent=0 // pred_check_branch
    %38 = sbr.rel (0) target = $region41
  $region40: #{tpu_custom_call.1} parent=0 // pred_region
    _
  $region41: #{tpu_custom_call.1} parent=0 // pred_fallthru
    _
  // Predicated region
  $region42: #{tpu_custom_call.1} parent=0 // pred_check
    _
  $region43: #{tpu_custom_call.1} parent=0 // pred_check_branch
    %40 = sbr.rel (0) target = $region45
  $region44: #{tpu_custom_call.1} parent=0 // pred_region
    _
  $region45: #{tpu_custom_call.1} parent=0 // pred_fallthru
    _
  // Predicated region
  $region46: #{tpu_custom_call.1} parent=0 // pred_check
    _
  $region47: #{tpu_custom_call.1} parent=0 // pred_check_branch
    %42 = sbr.rel (0) target = $region49
  $region48: #{tpu_custom_call.1} parent=0 // pred_region
    _
  $region49: #{tpu_custom_call.1} parent=0 // pred_fallthru
    _
  %v44 = vld [vmem:[%s0] sm:$0xf]
  %v45 = vld [vmem:[%s3] sm:$0x3]
  %v46 = vld [vmem:[%s1] sm:$0xf]
  %v47 = vld [vmem:[%s4] sm:$0x3]
  %vm48 = vcmask 31744
  %v50 = vsel %vm48, %v46, 0
  %vm52 = vcmask 1041408
  %v54 = vsel %vm52, %v47, 0
  %56 = vmatpush.bf16.msra.mxu0 0
  %57 = vmatpush.bf16.msra.mxu0 0
  %58 = vmatpush.bf16.msra.mxu0 0
  %59 = vmatpush.bf16.msra.mxu0 0
  %60 = vmatpush.bf16.msra.mxu0 0
  %61 = vmatpush.bf16.msra.mxu0 0
  %62 = vmatpush.bf16.msra.mxu0 0
  %63 = vmatpush.bf16.msra.mxu0 %v54
  %64 = vmatmul.bf16.gmra.mxu0 %v50
  %v65 = vpop.f32.mrf.mxu0
  %v66 = vadd.f32 0.0, %v65
  %v67 = vpop.f32.mrf.mxu0
  %68 = vdwg.mxu0
  %v70 = vsel %vm48, %v44, 0
  %v73 = vsel %vm52, %v45, 0
  %75 = vmatpush.bf16.msra.mxu0 0
  %76 = vmatpush.bf16.msra.mxu0 0
  %77 = vmatpush.bf16.msra.mxu0 0
  %78 = vmatpush.bf16.msra.mxu0 0
  %79 = vmatpush.bf16.msra.mxu0 0
  %80 = vmatpush.bf16.msra.mxu0 0
  %81 = vmatpush.bf16.msra.mxu0 0
  %82 = vmatpush.bf16.msra.mxu0 %v73
  %83 = vmatmul.bf16.gmra.mxu0 %v70
  %v84 = vpop.f32.mrf.mxu0
  %v85 = vadd.f32 %v66, %v84
  %v86 = vpop.f32.mrf.mxu0
  %87 = vdwg.mxu0
  %v88 = vld [vmem:[%s5] sm:$0x1]
  %v90 = vperm.slane %v88, 0
  %v92 = vadd.f32 %v85, %v90
  %v93 = vmax.f32 %v92, 0.0
  %v94 = vpack.c.bf16 %v93, %v93
  %v95 = vld [vmem:[%s6] sm:$0xf]
  %v96 = vld [vmem:[%s6 + $0x4] sm:$0xf]
  %v97 = vld [vmem:[%s6 + $0x8] sm:$0xf]
  %v98 = vld [vmem:[%s6 + $0xc] sm:$0xf]
  %v99 = vld [vmem:[%s7] sm:$0x1]
  %v101 = vperm.slane %v99, 0
  %v107 = vunpack.c.l.b16 %v95
  %v108 = vunpack.c.l.b16 %v96
  %v109 = vunpack.c.l.b16 %v97
  %v110 = vunpack.c.l.b16 %v98
  %v111 = vpack.c.b16 %v108, %v107
  %v112 = vpack.c.b16 %v110, %v109
  %vm115 = vcmask 261120
  %v117 = vsel %vm115, %v94, 0
  %119 = vmatpush.bf16.msra.mxu0 0
  %120 = vmatpush.bf16.msra.mxu0 0
  %121 = vmatpush.bf16.msra.mxu0 0
  %122 = vmatpush.bf16.msra.mxu0 0
  %123 = vmatpush.bf16.msra.mxu0 0
  %124 = vmatpush.bf16.msra.mxu0 0
  %125 = vmatpush.bf16.msra.mxu0 %v112
  %126 = vmatpush.bf16.msra.mxu0 %v111
  %127 = vmatmul.bf16.gmra.mxu0 %v117
  %v128 = vpop.f32.mrf.mxu0
  %v129 = vadd.f32 %v101, %v128
  %v130 = vpop.f32.mrf.mxu0
  %131 = vdwg.mxu0
  %v132 = vmax.f32 %v129, 0.0
  %v133 = vpack.c.bf16 %v132, %v132
  %v134 = vld [vmem:[%s8] sm:$0xf]
  %v135 = vld [vmem:[%s8 + $0x4] sm:$0xf]
  %v136 = vld [vmem:[%s8 + $0x8] sm:$0xf]
  %v137 = vld [vmem:[%s8 + $0xc] sm:$0xf]
  %v138 = vld [vmem:[%s9] sm:$0x1]
  %v140 = vperm.slane %v138, 0
  %v146 = vunpack.c.l.b16 %v134
  %v147 = vunpack.c.l.b16 %v135
  %v148 = vunpack.c.l.b16 %v136
  %v149 = vunpack.c.l.b16 %v137
  %v150 = vpack.c.b16 %v147, %v146
  %v151 = vpack.c.b16 %v149, %v148
  %v155 = vsel %vm115, %v133, 0
  %157 = vmatpush.bf16.msra.mxu0 0
  %158 = vmatpush.bf16.msra.mxu0 0
  %159 = vmatpush.bf16.msra.mxu0 0
  %160 = vmatpush.bf16.msra.mxu0 0
  %161 = vmatpush.bf16.msra.mxu0 0
  %162 = vmatpush.bf16.msra.mxu0 0
  %163 = vmatpush.bf16.msra.mxu0 %v151
  %164 = vmatpush.bf16.msra.mxu0 %v150
  %165 = vmatmul.bf16.gmra.mxu0 %v155
  %v166 = vpop.f32.mrf.mxu0
  %v167 = vadd.f32 %v140, %v166
  %v168 = vpop.f32.mrf.mxu0
  %169 = vdwg.mxu0
  %v170 = vtanh.pop %v167
  %v171 = vld [vmem:[%s10] sm:$0xf]
  %v172 = vld [vmem:[%s10 + $0x4] sm:$0xf]
  %v173 = vld [vmem:[%s10 + $0x8] sm:$0xf]
  %v174 = vld [vmem:[%s10 + $0xc] sm:$0xf]
  %v175 = vld [vmem:[%s11] sm:$0x1]
  %v177 = vperm.slane %v175, 0
  %v183 = vunpack.c.l.b16 %v171
  %v184 = vunpack.c.l.b16 %v172
  %v185 = vunpack.c.l.b16 %v173
  %v186 = vunpack.c.l.b16 %v174
  %v187 = vpack.c.b16 %v184, %v183
  %v188 = vpack.c.b16 %v186, %v185
  %191 = vmatpush.bf16.msra.mxu0 0
  %192 = vmatpush.bf16.msra.mxu0 0
  %193 = vmatpush.bf16.msra.mxu0 0
  %194 = vmatpush.bf16.msra.mxu0 0
  %195 = vmatpush.bf16.msra.mxu0 0
  %196 = vmatpush.bf16.msra.mxu0 0
  %197 = vmatpush.bf16.msra.mxu0 %v188
  %198 = vmatpush.bf16.msra.mxu0 %v187
  %199 = vmatmul.bf16.gmra.mxu0 %v155
  %v200 = vpop.f32.mrf.mxu0
  %v201 = vadd.f32 %v177, %v200
  %v202 = vpop.f32.mrf.mxu0
  %203 = vdwg.mxu0
  %v204 = vld [vmem:[%s2] sm:$0xff]
  %v205 = vmul.f32 %v170, 1.442695
  %v206 = vpow.pop %v205
  %v207 = vmul.f32 %v204, %v206
  %v208 = vadd.f32 %v207, %v201
  %209 = vst.msk [vmem:[%s12] sm:$0xff] %vm48, %v208
  %v210 = vsel %vm48, %v170, 0.0
  %211 = vadd.xlane.f32.xlu0 %v210
  %v212 = vpop.xlane.xlu0 %211
  %vm213 = vcmask 7168
  %214 = vst.msk [vmem:[%s13] sm:$0xff] %vm213, %v212
  // Predicated region
  $region50: #{tpu_custom_call.1} parent=0 // pred_check
    _
  $region51: #{tpu_custom_call.1} parent=0 // pred_check_branch
    %216 = sbr.rel (0) target = $region53
  $region52: #{tpu_custom_call.1} parent=0 // pred_region
    _
  $region53: #{tpu_custom_call.1} parent=0 // pred_fallthru
    _
  // Predicated region
  $region54: #{tpu_custom_call.1} parent=0 // pred_check
    _
  $region55: #{tpu_custom_call.1} parent=0 // pred_check_branch
    %218 = sbr.rel (0) target = $region57
  $region56: #{tpu_custom_call.1} parent=0 // pred_region
    _
  $region57: #{tpu_custom_call.1} parent=0 // pred_fallthru
    _
  // Predicated region
  $region58: #{tpu_custom_call.1} parent=0 // pred_check
    _
  $region59: #{tpu_custom_call.1} parent=0 // pred_check_branch
    %220 = sbr.rel (0) target = $region61
  $region60: #{tpu_custom_call.1} parent=0 // pred_region
    _
  $region61: #{tpu_custom_call.1} parent=0 // pred_fallthru
    _
  // Predicated region
  $region62: #{tpu_custom_call.1} parent=0 // pred_check
    _
  $region63: #{tpu_custom_call.1} parent=0 // pred_check_branch
    %222 = sbr.rel (0) target = $region65
  $region64: #{tpu_custom_call.1} parent=0 // pred_region
    _
  $region65: #{tpu_custom_call.1} parent=0 // pred_fallthru
    _

</llo_original>
